<compile_context>
chip_gen: v7x
topology: tpu7x:2x2x1
jax: 0.10.0
libtpu: 0.0.40
codegen_flags: <defaults>
</compile_context>

<pallas_src>
import functools

import jax
import jax.numpy as jnp
from jax.experimental import pallas as pl
from jax.experimental.pallas import tpu as pltpu

_LANE = 128
_MAX_TS = 1024  # sublane rows per spatial block; 2*(3+3)*1024*128*4B ~= 6.3 MB dbl-buffered


def _conv1x1_act_kernel(w_ref, b_ref, x_ref, o_ref, *, cin, cout):
    # w_ref: SMEM (cout, cin) f32 scalars (pre-scaled by 1/sqrt(6))
    # b_ref: SMEM (cout,)     f32 scalars (pre-scaled by 1/sqrt(6))
    # x_ref: VMEM (1, cin,  ts, 128) dense per-channel spatial tiles
    # o_ref: VMEM (1, cout, ts, 128)
    for co in range(cout):
        # Re-load x_ref[0, ci] per output channel instead of hoisting all cin
        # tiles: keeps live vreg pressure at ~1 accumulator tile.
        acc = w_ref[co, 0] * x_ref[0, 0]
        for ci in range(1, cin):
            acc = acc + w_ref[co, ci] * x_ref[0, ci]
        y = acc + b_ref[co]
        # y' * relu(y') == y * relu(y) / 6   because y' = y / sqrt(6).
        o_ref[0, co] = y * jnp.maximum(y, 0.0)


def model_forward(x_nchw, weight, bias):
    """x_nchw: (N, Cin, H, W) f32; weight: (Cout, Cin, 1, 1); bias: (Cout,)."""
    N, Cin, H, W = x_nchw.shape
    Cout = weight.shape[0]
    HW = H * W

    # Flatten the spatial axis; pad only to a lane multiple (skip when aligned).
    HWp = ((HW + _LANE - 1) // _LANE) * _LANE
    S = HWp // _LANE
    xf = x_nchw.reshape(N, Cin, HW)
    if HWp != HW:
        xf = jnp.pad(xf, ((0, 0), (0, 0), (0, HWp - HW)))
    xt = xf.reshape(N, Cin, S, _LANE)  # channel-major, lane-dense

    # Spatial tile: full extent when small (exempt from the /8 sublane rule),
    # otherwise a fixed large multiple-of-8 tile with a cdiv grid (ragged last
    # block is masked on write; garbage tail reads are harmless elementwise).
    if S <= _MAX_TS:
        ts, gs = S, 1
    else:
        ts, gs = _MAX_TS, pl.cdiv(S, _MAX_TS)

    inv_sqrt6 = 1.0 / (6.0 ** 0.5)
    w2 = (weight.reshape(Cout, Cin) * inv_sqrt6).astype(jnp.float32)
    b1 = (bias * inv_sqrt6).astype(jnp.float32)

    kernel = functools.partial(_conv1x1_act_kernel, cin=Cin, cout=Cout)

    out_t = pl.pallas_call(
        kernel,
        out_shape=jax.ShapeDtypeStruct((N, Cout, S, _LANE), jnp.float32),
        grid=(N, gs),
        in_specs=[
            pl.BlockSpec(memory_space=pltpu.SMEM),   # weights as SMEM scalars
            pl.BlockSpec(memory_space=pltpu.SMEM),   # bias as SMEM scalars
            pl.BlockSpec((1, Cin, ts, _LANE), lambda n, s: (n, 0, s, 0)),
        ],
        out_specs=pl.BlockSpec((1, Cout, ts, _LANE), lambda n, s: (n, 0, s, 0)),
        compiler_params=pltpu.CompilerParams(
            dimension_semantics=("parallel", "parallel"),
            vmem_limit_bytes=32 * 1024 * 1024),
    )(w2, b1, xt)

    # Interior of the padded-conv output (slice/reshape is free when HWp == HW).
    interior = out_t.reshape(N, Cout, HWp)
    if HWp != HW:
        interior = interior[:, :, :HW]
    interior = interior.reshape(N, Cout, H, W)

    # Conv zero-padding ring for k=1: out = bias*relu(bias)/6 == b1*relu(b1).
    # Single pad pass to place the interior, then four thin O(H+W) strips.
    border = b1 * jnp.maximum(b1, 0.0)               # (Cout,)
    strip = border[None, :, None]                    # broadcasts over N / length
    full = jnp.pad(interior, ((0, 0), (0, 0), (1, 1), (1, 1)))
    full = full.at[:, :, 0, :].set(strip)
    full = full.at[:, :, H + 1, :].set(strip)
    full = full.at[:, :, :, 0].set(strip)
    full = full.at[:, :, :, W + 1].set(strip)
    return full


if __name__ == "__main__":
    key = jax.random.PRNGKey(0)
    k_x, k_w, k_b = jax.random.split(key, 3)

    # Small shapes consistent with the module: Conv2d(3, 3, 1, padding=1).
    N, Cin, H, W = 2, 3, 16, 16
    Cout = 3

    x = jax.random.normal(k_x, (N, Cin, H, W), dtype=jnp.float32)

    # Deterministic init mimicking PyTorch Conv2d defaults (+-1/sqrt(fan_in)).
    bound = 1.0 / (Cin ** 0.5)
    weight = jax.random.uniform(k_w, (Cout, Cin, 1, 1), jnp.float32, -bound, bound)
    bias = jax.random.uniform(k_b, (Cout,), jnp.float32, -bound, bound)

    fwd = jax.jit(model_forward)
    out = jax.block_until_ready(fwd(x, weight, bias))

    # Pure-JAX reference (stays in NCHW).
    xp = jnp.pad(x, ((0, 0), (0, 0), (1, 1), (1, 1)))
    y_ref = jnp.einsum("nchw,oc->nohw", xp, weight.reshape(Cout, Cin)) \
        + bias[None, :, None, None]
    ref = y_ref * jnp.maximum(y_ref, 0.0) / 6.0

    assert out.shape == (N, Cout, H + 2, W + 2)
    assert jnp.allclose(out, ref, atol=1e-5, rtol=1e-5)

    print("KERNEL_OK")
</pallas_src>

<mosaic_0001>
module attributes {stable_mosaic.version = 11 : i64} {
  func.func @_conv1x1_act_kernel(%arg0: i32, %arg1: i32, %arg2: memref<3x3xf32, #tpu.memory_space<smem>>, %arg3: memref<3xf32, #tpu.memory_space<smem>>, %arg4: memref<1x3x2x128xf32, #tpu.memory_space<vmem>>, %arg5: memref<1x3x2x128xf32, #tpu.memory_space<vmem>>) attributes {dimension_semantics = [#tpu.dimension_semantics<parallel>, #tpu.dimension_semantics<parallel>], iteration_bounds = array<i64: 2, 1>, scalar_prefetch = 0 : i64, scratch_operands = 0 : i64, tpu.core_type = #tpu.core_type<tc>, window_params = [{transform_indices = @transform_0, window_bounds = array<i64: 3, 3>}, {transform_indices = @transform_1, window_bounds = array<i64: 3>}, {transform_indices = @transform_2, window_bounds = array<i64: 1, 3, 2, 128>}, {transform_indices = @transform_3, window_bounds = array<i64: 1, 3, 2, 128>}]} {
    %c0 = arith.constant 0 : index
    %c0_0 = arith.constant 0 : index
    %0 = memref.load %arg2[%c0, %c0_0] : memref<3x3xf32, #tpu.memory_space<smem>>
    %c0_1 = arith.constant 0 : index
    %c0_2 = arith.constant 0 : index
    %c0_3 = arith.constant 0 : index
    %c0_4 = arith.constant 0 : index
    %1 = vector.load %arg4[%c0_1, %c0_2, %c0_3, %c0_4] : memref<1x3x2x128xf32, #tpu.memory_space<vmem>>, vector<1x1x2x128xf32>
    %2 = vector.shape_cast %1 : vector<1x1x2x128xf32> to vector<2x128xf32>
    %3 = vector.broadcast %0 : f32 to vector<2x128xf32>
    %4 = arith.mulf %3, %2 : vector<2x128xf32>
    %c0_5 = arith.constant 0 : index
    %c1 = arith.constant 1 : index
    %5 = memref.load %arg2[%c0_5, %c1] : memref<3x3xf32, #tpu.memory_space<smem>>
    %c0_6 = arith.constant 0 : index
    %c1_7 = arith.constant 1 : index
    %c0_8 = arith.constant 0 : index
    %c0_9 = arith.constant 0 : index
    %6 = vector.load %arg4[%c0_6, %c1_7, %c0_8, %c0_9] : memref<1x3x2x128xf32, #tpu.memory_space<vmem>>, vector<1x1x2x128xf32>
    %7 = vector.shape_cast %6 : vector<1x1x2x128xf32> to vector<2x128xf32>
    %8 = vector.broadcast %5 : f32 to vector<2x128xf32>
    %9 = arith.mulf %8, %7 : vector<2x128xf32>
    %10 = arith.addf %4, %9 : vector<2x128xf32>
    %c0_10 = arith.constant 0 : index
    %c2 = arith.constant 2 : index
    %11 = memref.load %arg2[%c0_10, %c2] : memref<3x3xf32, #tpu.memory_space<smem>>
    %c0_11 = arith.constant 0 : index
    %c2_12 = arith.constant 2 : index
    %c0_13 = arith.constant 0 : index
    %c0_14 = arith.constant 0 : index
    %12 = vector.load %arg4[%c0_11, %c2_12, %c0_13, %c0_14] : memref<1x3x2x128xf32, #tpu.memory_space<vmem>>, vector<1x1x2x128xf32>
    %13 = vector.shape_cast %12 : vector<1x1x2x128xf32> to vector<2x128xf32>
    %14 = vector.broadcast %11 : f32 to vector<2x128xf32>
    %15 = arith.mulf %14, %13 : vector<2x128xf32>
    %16 = arith.addf %10, %15 : vector<2x128xf32>
    %c0_15 = arith.constant 0 : index
    %17 = memref.load %arg3[%c0_15] : memref<3xf32, #tpu.memory_space<smem>>
    %18 = vector.broadcast %17 : f32 to vector<2x128xf32>
    %19 = arith.addf %16, %18 : vector<2x128xf32>
    %cst = arith.constant 0.000000e+00 : f32
    %20 = vector.broadcast %cst : f32 to vector<2x128xf32>
    %21 = arith.maximumf %19, %20 : vector<2x128xf32>
    %22 = arith.mulf %19, %21 : vector<2x128xf32>
    %c0_16 = arith.constant 0 : index
    %c0_17 = arith.constant 0 : index
    %c0_18 = arith.constant 0 : index
    %c0_19 = arith.constant 0 : index
    %23 = vector.load %arg5[%c0_16, %c0_17, %c0_18, %c0_19] : memref<1x3x2x128xf32, #tpu.memory_space<vmem>>, vector<1x1x2x128xf32>
    %24 = vector.shape_cast %23 : vector<1x1x2x128xf32> to vector<2x128xf32>
    %25 = vector.shape_cast %22 : vector<2x128xf32> to vector<1x1x2x128xf32>
    tpu.vector_store %arg5[%c0_16, %c0_17, %c0_18, %c0_19], %25 {strides = array<i32>} : memref<1x3x2x128xf32, #tpu.memory_space<vmem>>, vector<1x1x2x128xf32>,
    %c1_20 = arith.constant 1 : index
    %c0_21 = arith.constant 0 : index
    %26 = memref.load %arg2[%c1_20, %c0_21] : memref<3x3xf32, #tpu.memory_space<smem>>
    %c0_22 = arith.constant 0 : index
    %c0_23 = arith.constant 0 : index
    %c0_24 = arith.constant 0 : index
    %c0_25 = arith.constant 0 : index
    %27 = vector.load %arg4[%c0_22, %c0_23, %c0_24, %c0_25] : memref<1x3x2x128xf32, #tpu.memory_space<vmem>>, vector<1x1x2x128xf32>
    %28 = vector.shape_cast %27 : vector<1x1x2x128xf32> to vector<2x128xf32>
    %29 = vector.broadcast %26 : f32 to vector<2x128xf32>
    %30 = arith.mulf %29, %28 : vector<2x128xf32>
    %c1_26 = arith.constant 1 : index
    %c1_27 = arith.constant 1 : index
    %31 = memref.load %arg2[%c1_26, %c1_27] : memref<3x3xf32, #tpu.memory_space<smem>>
    %c0_28 = arith.constant 0 : index
    %c1_29 = arith.constant 1 : index
    %c0_30 = arith.constant 0 : index
    %c0_31 = arith.constant 0 : index
    %32 = vector.load %arg4[%c0_28, %c1_29, %c0_30, %c0_31] : memref<1x3x2x128xf32, #tpu.memory_space<vmem>>, vector<1x1x2x128xf32>
    %33 = vector.shape_cast %32 : vector<1x1x2x128xf32> to vector<2x128xf32>
    %34 = vector.broadcast %31 : f32 to vector<2x128xf32>
    %35 = arith.mulf %34, %33 : vector<2x128xf32>
    %36 = arith.addf %30, %35 : vector<2x128xf32>
    %c1_32 = arith.constant 1 : index
    %c2_33 = arith.constant 2 : index
    %37 = memref.load %arg2[%c1_32, %c2_33] : memref<3x3xf32, #tpu.memory_space<smem>>
    %c0_34 = arith.constant 0 : index
    %c2_35 = arith.constant 2 : index
    %c0_36 = arith.constant 0 : index
    %c0_37 = arith.constant 0 : index
    %38 = vector.load %arg4[%c0_34, %c2_35, %c0_36, %c0_37] : memref<1x3x2x128xf32, #tpu.memory_space<vmem>>, vector<1x1x2x128xf32>
    %39 = vector.shape_cast %38 : vector<1x1x2x128xf32> to vector<2x128xf32>
    %40 = vector.broadcast %37 : f32 to vector<2x128xf32>
    %41 = arith.mulf %40, %39 : vector<2x128xf32>
    %42 = arith.addf %36, %41 : vector<2x128xf32>
    %c1_38 = arith.constant 1 : index
    %43 = memref.load %arg3[%c1_38] : memref<3xf32, #tpu.memory_space<smem>>
    %44 = vector.broadcast %43 : f32 to vector<2x128xf32>
    %45 = arith.addf %42, %44 : vector<2x128xf32>
    %cst_39 = arith.constant 0.000000e+00 : f32
    %46 = vector.broadcast %cst_39 : f32 to vector<2x128xf32>
    %47 = arith.maximumf %45, %46 : vector<2x128xf32>
    %48 = arith.mulf %45, %47 : vector<2x128xf32>
    %c0_40 = arith.constant 0 : index
    %c1_41 = arith.constant 1 : index
    %c0_42 = arith.constant 0 : index
    %c0_43 = arith.constant 0 : index
    %49 = vector.load %arg5[%c0_40, %c1_41, %c0_42, %c0_43] : memref<1x3x2x128xf32, #tpu.memory_space<vmem>>, vector<1x1x2x128xf32>
    %50 = vector.shape_cast %49 : vector<1x1x2x128xf32> to vector<2x128xf32>
    %51 = vector.shape_cast %48 : vector<2x128xf32> to vector<1x1x2x128xf32>
    tpu.vector_store %arg5[%c0_40, %c1_41, %c0_42, %c0_43], %51 {strides = array<i32>} : memref<1x3x2x128xf32, #tpu.memory_space<vmem>>, vector<1x1x2x128xf32>,
    %c2_44 = arith.constant 2 : index
    %c0_45 = arith.constant 0 : index
    %52 = memref.load %arg2[%c2_44, %c0_45] : memref<3x3xf32, #tpu.memory_space<smem>>
    %c0_46 = arith.constant 0 : index
    %c0_47 = arith.constant 0 : index
    %c0_48 = arith.constant 0 : index
    %c0_49 = arith.constant 0 : index
    %53 = vector.load %arg4[%c0_46, %c0_47, %c0_48, %c0_49] : memref<1x3x2x128xf32, #tpu.memory_space<vmem>>, vector<1x1x2x128xf32>
    %54 = vector.shape_cast %53 : vector<1x1x2x128xf32> to vector<2x128xf32>
    %55 = vector.broadcast %52 : f32 to vector<2x128xf32>
    %56 = arith.mulf %55, %54 : vector<2x128xf32>
    %c2_50 = arith.constant 2 : index
    %c1_51 = arith.constant 1 : index
    %57 = memref.load %arg2[%c2_50, %c1_51] : memref<3x3xf32, #tpu.memory_space<smem>>
    %c0_52 = arith.constant 0 : index
    %c1_53 = arith.constant 1 : index
    %c0_54 = arith.constant 0 : index
    %c0_55 = arith.constant 0 : index
    %58 = vector.load %arg4[%c0_52, %c1_53, %c0_54, %c0_55] : memref<1x3x2x128xf32, #tpu.memory_space<vmem>>, vector<1x1x2x128xf32>
    %59 = vector.shape_cast %58 : vector<1x1x2x128xf32> to vector<2x128xf32>
    %60 = vector.broadcast %57 : f32 to vector<2x128xf32>
    %61 = arith.mulf %60, %59 : vector<2x128xf32>
    %62 = arith.addf %56, %61 : vector<2x128xf32>
    %c2_56 = arith.constant 2 : index
    %c2_57 = arith.constant 2 : index
    %63 = memref.load %arg2[%c2_56, %c2_57] : memref<3x3xf32, #tpu.memory_space<smem>>
    %c0_58 = arith.constant 0 : index
    %c2_59 = arith.constant 2 : index
    %c0_60 = arith.constant 0 : index
    %c0_61 = arith.constant 0 : index
    %64 = vector.load %arg4[%c0_58, %c2_59, %c0_60, %c0_61] : memref<1x3x2x128xf32, #tpu.memory_space<vmem>>, vector<1x1x2x128xf32>
    %65 = vector.shape_cast %64 : vector<1x1x2x128xf32> to vector<2x128xf32>
    %66 = vector.broadcast %63 : f32 to vector<2x128xf32>
    %67 = arith.mulf %66, %65 : vector<2x128xf32>
    %68 = arith.addf %62, %67 : vector<2x128xf32>
    %c2_62 = arith.constant 2 : index
    %69 = memref.load %arg3[%c2_62] : memref<3xf32, #tpu.memory_space<smem>>
    %70 = vector.broadcast %69 : f32 to vector<2x128xf32>
    %71 = arith.addf %68, %70 : vector<2x128xf32>
    %cst_63 = arith.constant 0.000000e+00 : f32
    %72 = vector.broadcast %cst_63 : f32 to vector<2x128xf32>
    %73 = arith.maximumf %71, %72 : vector<2x128xf32>
    %74 = arith.mulf %71, %73 : vector<2x128xf32>
    %c0_64 = arith.constant 0 : index
    %c2_65 = arith.constant 2 : index
    %c0_66 = arith.constant 0 : index
    %c0_67 = arith.constant 0 : index
    %75 = vector.load %arg5[%c0_64, %c2_65, %c0_66, %c0_67] : memref<1x3x2x128xf32, #tpu.memory_space<vmem>>, vector<1x1x2x128xf32>
    %76 = vector.shape_cast %75 : vector<1x1x2x128xf32> to vector<2x128xf32>
    %77 = vector.shape_cast %74 : vector<2x128xf32> to vector<1x1x2x128xf32>
    tpu.vector_store %arg5[%c0_64, %c2_65, %c0_66, %c0_67], %77 {strides = array<i32>} : memref<1x3x2x128xf32, #tpu.memory_space<vmem>>, vector<1x1x2x128xf32>,
    return
  }
  func.func @transform_0(%arg0: i32, %arg1: i32) -> (i32, i32) {
    %c0_i32 = arith.constant 0 : i32
    %c0_i32_0 = arith.constant 0 : i32
    %c0_i32_1 = arith.constant 0 : i32
    return %c0_i32, %c0_i32_0 : i32, i32
  }
  func.func @transform_1(%arg0: i32, %arg1: i32) -> i32 {
    %c0_i32 = arith.constant 0 : i32
    %c0_i32_0 = arith.constant 0 : i32
    return %c0_i32 : i32
  }
  func.func @transform_2(%arg0: i32, %arg1: i32) -> (i32, i32, i32, i32) {
    %c0_i32 = arith.constant 0 : i32
    %c0_i32_0 = arith.constant 0 : i32
    %c0_i32_1 = arith.constant 0 : i32
    return %arg0, %c0_i32, %arg1, %c0_i32_0 : i32, i32, i32, i32
  }
  func.func @transform_3(%arg0: i32, %arg1: i32) -> (i32, i32, i32, i32) {
    %c0_i32 = arith.constant 0 : i32
    %c0_i32_0 = arith.constant 0 : i32
    %c0_i32_1 = arith.constant 0 : i32
    return %arg0, %c0_i32, %arg1, %c0_i32_0 : i32, i32, i32, i32
  }
}

</mosaic_0001>

<llo_original>
// kernel: model_forward.1
$region0: #{model_forward.1}
  #allocation0 [shape = 'u32[]', space=smem, size = 0x4, offset = 0x4, fixed_abs, tag = 'smem constant byte address 0x4 - core index']
  #allocation1 [shape = 'u32[144,128]{1,0:T(1,128)}', space=vmem, size = 0x12000, scoped, tag = 'internal scratch']
  %s0 = inlined_call_operand.vmem [shape: f32[3,3], index: 0, kind: input, shape index: {}]
  %s1 = inlined_call_operand.vmem [shape: f32[3], index: 1, kind: input, shape index: {}]
  %s2 = inlined_call_operand.vmem [shape: f32[2,3,2,128], index: 2, kind: input, shape index: {}]
  %s3 = inlined_call_operand.vmem [shape: f32[2,3,2,128], index: 3, kind: output, shape index: {}]
  %s4 = sld [smem:[#allocation0]]
  $region53: #{model_forward.1} parent=0
    _
  %s6 = ssub.s32 1, %s4
  %s7 = scalar_select 0, %s6, %s4
  $region1: #{model_forward.1} parent=0
    #allocation2 [shape = 'u8[2048]{0}', space=smem, size = 0x800, scoped, tag = 'input window, operand 0, single buffered']
    #allocation3 [shape = 's32[2]{0}', space=sflag, size = 0x8, scoped, tag = 'scoped memory for model_forward.1']
    #allocation4 [shape = 'u8[512]{0}', space=smem, size = 0x200, scoped, tag = 'input window, operand 1, single buffered']
    #allocation5 [shape = 's32[1]{0}', space=sflag, size = 0x4, scoped, tag = 'scoped memory for model_forward.1']
    %8 = vsyncpa [#allocation3], 0
    %9 = vsyncpa [#allocation5], 0
    loop: start=0, step=1, limit=4
    $region2: #{model_forward.1} parent=1 // loop_pre_header
      _
    $region3: #{model_forward.1} parent=1 // loop_header
      %s11 = sphi 0, %s15
      %p12 = scmp.ge.s32.totalorder %s11, 4
      %s18 = sphi 0, %s30
      %s19 = sphi 0, %s26
      %s20 = sphi 0, %s18
      %s21 = sphi 0, %s19
      %s22 = sphi 0, %s20
      %s23 = sphi 0, %s21
      %s31 = sphi 0, %s31
      %s33 = sphi 0, %s31
      %s34 = sphi 0, %s33
      %s48 = sphi 0, %s34
      %s52 = sphi 0, %s52
      %s54 = sphi 0, %s52
      %s55 = sphi 0, %s54
      %s69 = sphi 0, %s55
      %s77 = sphi 0, %s79
      %s80 = sphi 0, %s77
      %s81 = sphi 0, %s80
      %s97 = sphi 0, %s81
      %s105 = sphi 0, %s107
      %s108 = sphi 0, %s105
      %s109 = sphi 0, %s108
      %s125 = sphi 0, %s109
    $region4: #{model_forward.1} parent=1 // loop_header_branch
      %14 = sbr.rel (%p12) target = $region8
    $region5: #{model_forward.1} parent=1 // loop_body
      %s16 = ssub.s32 %s11, 1
      %s17 = ssub.s32 %s11, 2
      %s24 = sadd.s32 1, %s19
      %p25 = scmp.ge.s32.totalorder %s24, 1
      %s26 = scalar_select %p25, 0, %s24
      %s27 = sadd.s32 1, %s18
      %s28 = scalar_select %p25, %s27, %s18
      %p29 = scmp.ge.s32.totalorder %s28, 2
      %s30 = scalar_select %p29, 0, %s28
      %s32 = sadd.s32 %s31, 1
      %p35 = scmp.eq.s32.totalorder %s11, 1
      %p36 = scmp.ne.s32.totalorder %s31, %s33
      %p37 = scmp.eq.s32.totalorder %s11, 0
      %p38 = por %p36, %p37
      %p39 = scmp.ne.s32.totalorder %s31, %s33
      %p40 = scmp.eq.s32.totalorder %s16, 1
      %p41 = por %p39, %p40
      %p42 = scmp.ne.s32.totalorder %s33, %s34
      %p43 = scmp.eq.s32.totalorder %s16, 0
      %p44 = por %p42, %p43
      %p45 = scmp.ne.s32.totalorder %s33, %s34
      %p46 = scmp.eq.s32.totalorder %s17, 1
      %p47 = por %p45, %p46
      %p49 = scmp.ne.s32.totalorder %s34, %s48
      %p50 = scmp.eq.s32.totalorder %s17, 0
      %p51 = por %p49, %p50
      %s53 = sadd.s32 %s52, 1
      %p56 = scmp.eq.s32.totalorder %s11, 1
      %p57 = scmp.ne.s32.totalorder %s52, %s54
      %p58 = scmp.eq.s32.totalorder %s11, 0
      %p59 = por %p57, %p58
      %p60 = scmp.ne.s32.totalorder %s52, %s54
      %p61 = scmp.eq.s32.totalorder %s16, 1
      %p62 = por %p60, %p61
      %p63 = scmp.ne.s32.totalorder %s54, %s55
      %p64 = scmp.eq.s32.totalorder %s16, 0
      %p65 = por %p63, %p64
      %p66 = scmp.ne.s32.totalorder %s54, %s55
      %p67 = scmp.eq.s32.totalorder %s17, 1
      %p68 = por %p66, %p67
      %p70 = scmp.ne.s32.totalorder %s55, %s69
      %p71 = scmp.eq.s32.totalorder %s17, 0
      %p72 = por %p70, %p71
      %s73 = ssub.s32 %s18, %s30
      %s74 = ssub.s32 %s19, %s26
      %s75 = sor.u32 %s73, %s74
      %p76 = scmp.eq.s32.totalorder %s75, 0
      %s78 = sadd.s32 %s77, 1
      %s79 = scalar_select %p76, %s77, %s78
      %p82 = pneg %p76
      %p83 = scmp.eq.s32.totalorder %s11, 1
      %p84 = por %p82, %p83
      %p85 = scmp.ne.s32.totalorder %s77, %s80
      %p86 = scmp.eq.s32.totalorder %s11, 0
      %p87 = por %p85, %p86
      %p88 = scmp.ne.s32.totalorder %s77, %s80
      %p89 = scmp.eq.s32.totalorder %s16, 1
      %p90 = por %p88, %p89
      %p91 = scmp.ne.s32.totalorder %s80, %s81
      %p92 = scmp.eq.s32.totalorder %s16, 0
      %p93 = por %p91, %p92
      %p94 = scmp.ne.s32.totalorder %s80, %s81
      %p95 = scmp.eq.s32.totalorder %s17, 1
      %p96 = por %p94, %p95
      %p98 = scmp.ne.s32.totalorder %s81, %s97
      %p99 = scmp.eq.s32.totalorder %s17, 0
      %p100 = por %p98, %p99
      %s101 = ssub.s32 %s18, %s30
      %s102 = ssub.s32 %s19, %s26
      %s103 = sor.u32 %s101, %s102
      %p104 = scmp.eq.s32.totalorder %s103, 0
      %s106 = sadd.s32 %s105, 1
      %s107 = scalar_select %p104, %s105, %s106
      %p110 = pneg %p104
      %p111 = scmp.eq.s32.totalorder %s11, 1
      %p112 = por %p110, %p111
      %p113 = scmp.ne.s32.totalorder %s105, %s108
      %p114 = scmp.eq.s32.totalorder %s11, 0
      %p115 = por %p113, %p114
      %p116 = scmp.ne.s32.totalorder %s105, %s108
      %p117 = scmp.eq.s32.totalorder %s16, 1
      %p118 = por %p116, %p117
      %p119 = scmp.ne.s32.totalorder %s108, %s109
      %p120 = scmp.eq.s32.totalorder %s16, 0
      %p121 = por %p119, %p120
      %p122 = scmp.ne.s32.totalorder %s108, %s109
      %p123 = scmp.eq.s32.totalorder %s17, 1
      %p124 = por %p122, %p123
      %p126 = scmp.ne.s32.totalorder %s109, %s125
      %p127 = scmp.eq.s32.totalorder %s17, 0
      %p128 = por %p126, %p127
      %p129 = scmp.le.s32.totalorder 1, %s11
      %p130 = scmp.lt.s32.totalorder %s11, 3
      %p131 = pnand %p129, %p130
      %p132 = pneg %p131
      // Predicated region
      $region9: #{model_forward.1} parent=5 // pred_check
        _
      $region10: #{model_forward.1} parent=5 // pred_check_branch
        %134 = sbr.rel (%p131) target = $region12
      $region11: #{model_forward.1} parent=5 // pred_region
        %s135 = ssub.s32 %s11, 1
        // Predicated region
        $region13: #{model_forward.1} parent=11 // pred_check
          %p136 = pneg %p44
        $region14: #{model_forward.1} parent=11 // pred_check_branch
          %138 = sbr.rel (%p136) target = $region16
        $region15: #{model_forward.1} parent=11 // pred_region
          %s140 = ssub.s32 64, 64
          %141 = vsyncadd [#allocation3], %s140
          %s143 = sshll.u32 %s0, 4
          %s144 = int_to_ptr.vmem [resolvable:$true] %s143
          %146 = dma.vmem_to_smem %s144, 64, [#allocation2], [#allocation3]
        $region16: #{model_forward.1} parent=11 // pred_fallthru
          _
        // Predicated region
        $region17: #{model_forward.1} parent=11 // pred_check
          %p147 = pneg %p65
        $region18: #{model_forward.1} parent=11 // pred_check_branch
          %149 = sbr.rel (%p147) target = $region20
        $region19: #{model_forward.1} parent=11 // pred_region
          %s151 = ssub.s32 16, 16
          %152 = vsyncadd [#allocation5], %s151
          %s154 = sshll.u32 %s1, 4
          %s155 = int_to_ptr.vmem [resolvable:$true] %s154
          %157 = dma.vmem_to_smem %s155, 16, [#allocation4], [#allocation5]
        $region20: #{model_forward.1} parent=11 // pred_fallthru
          _
      $region12: #{model_forward.1} parent=5 // pred_fallthru
        _
      %p158 = scmp.lt.s32.totalorder %s11, 2
      // Predicated region
      $region21: #{model_forward.1} parent=5 // pred_check
        %p159 = pneg %p158
      $region22: #{model_forward.1} parent=5 // pred_check_branch
        %161 = sbr.rel (%p159) target = $region24
      $region23: #{model_forward.1} parent=5 // pred_region
        // Predicated region
        $region25: #{model_forward.1} parent=23 // pred_check
          %p162 = pneg %p87
        $region26: #{model_forward.1} parent=23 // pred_check_branch
          %164 = sbr.rel (%p162) target = $region28
        $region27: #{model_forward.1} parent=23 // pred_region
          %p165 = scmp.lt.s32.totalorder %s18, 1
          %s166 = scalar_select %p165, %s18, 1
          %p167 = scmp.lt.s32.totalorder %s19, 0
          %s168 = scalar_select %p167, %s19, 0
          %s169 = smul.addr %s166, 3
          %s170 = sadd.s32 %s168, %s169
          %s171 = smul.addr %s170, 2
          %s172 = scalar_lea.vmem %s2, %s171
        $region28: #{model_forward.1} parent=23 // pred_fallthru
          _
      $region24: #{model_forward.1} parent=5 // pred_fallthru
        _
      %p173 = scmp.le.s32.totalorder 1, %s11
      %p174 = scmp.lt.s32.totalorder %s11, 3
      %p175 = pnand %p173, %p174
      %p176 = pneg %p175
      // Predicated region
      $region29: #{model_forward.1} parent=5 // pred_check
        _
      $region30: #{model_forward.1} parent=5 // pred_check_branch
        %178 = sbr.rel (%p175) target = $region32
      $region31: #{model_forward.1} parent=5 // pred_region
        %s179 = ssub.s32 %s11, 1
        // Predicated region
        $region33: #{model_forward.1} parent=31 // pred_check
          %p180 = pneg %p44
        $region34: #{model_forward.1} parent=31 // pred_check_branch
          %182 = sbr.rel (%p180) target = $region36
        $region35: #{model_forward.1} parent=31 // pred_region
          %183 = dma.done [#allocation3], 64
        $region36: #{model_forward.1} parent=31 // pred_fallthru
          _
        // Predicated region
        $region37: #{model_forward.1} parent=31 // pred_check
          %p184 = pneg %p65
        $region38: #{model_forward.1} parent=31 // pred_check_branch
          %186 = sbr.rel (%p184) target = $region40
        $region39: #{model_forward.1} parent=31 // pred_region
          %187 = dma.done [#allocation5], 16
        $region40: #{model_forward.1} parent=31 // pred_fallthru
          _
        %188 = sfence
        %p189 = pneg %p44
        %p190 = pneg %p41
        %p191 = pneg %p65
        %p192 = pneg %p62
        %p193 = scmp.lt.s32.totalorder %s20, 1
        %s194 = scalar_select %p193, %s20, 1
        %p195 = scmp.lt.s32.totalorder %s21, 0
        %s196 = scalar_select %p195, %s21, 0
        %s197 = smul.addr %s194, 3
        %s198 = sadd.s32 %s196, %s197
        %s199 = smul.addr %s198, 2
        %s200 = scalar_lea.vmem %s2, %s199
        %p201 = pneg %p93
        %p202 = pneg %p90
        %p203 = pneg %p121
        %p204 = pneg %p118
        %p205 = scmp.lt.s32.totalorder %s20, 1
        %s206 = scalar_select %p205, %s20, 1
        %p207 = scmp.lt.s32.totalorder %s21, 0
        %s208 = scalar_select %p207, %s21, 0
        %s209 = smul.addr %s206, 3
        %s210 = sadd.s32 %s208, %s209
        %s211 = smul.addr %s210, 2
        %s212 = scalar_lea.vmem %s3, %s211
        %p213 = scmp.lt.s32.totalorder %s20, 1
        %s214 = scalar_select %p213, %s20, 1
        %p215 = scmp.lt.s32.totalorder %s21, 0
        %s216 = scalar_select %p215, %s21, 0
        %s217 = smul.addr %s214, 3
        %s218 = sadd.s32 %s216, %s217
        %s219 = smul.addr %s218, 2
        %s220 = scalar_lea.vmem %s2, %s219
        %p221 = scmp.lt.s32.totalorder %s20, 1
        %s222 = scalar_select %p221, %s20, 1
        %p223 = scmp.lt.s32.totalorder %s21, 0
        %s224 = scalar_select %p223, %s21, 0
        %s225 = smul.addr %s222, 3
        %s226 = sadd.s32 %s224, %s225
        %s227 = smul.addr %s226, 2
        %s228 = scalar_lea.vmem %s3, %s227
        %s229 = sld [smem:[#allocation2]]
        %v230 = vld [vmem:[%s220] sm:$0x3]
        %v231 = vstv %s229
        %v232 = vmul.f32 %v231, %v230
        %s233 = sld [smem:[#allocation2 + $0x1]]
        %s234 = scalar_lea.vmem %s220, 2
        %v235 = vld [vmem:[%s234] sm:$0x3]
        %v236 = vstv %s233
        %v237 = vmul.f32 %v236, %v235
        %v238 = vadd.f32 %v232, %v237
        %s239 = sld [smem:[#allocation2 + $0x2]]
        %s240 = scalar_lea.vmem %s220, 4
        %v241 = vld [vmem:[%s240] sm:$0x3]
        %v242 = vstv %s239
        %v243 = vmul.f32 %v242, %v241
        %v244 = vadd.f32 %v238, %v243
        %s245 = sld [smem:[#allocation4]]
        %v246 = vstv %s245
        %v247 = vadd.f32 %v244, %v246
        %v248 = vmax.f32 %v247, 0.0
        %v249 = vmul.f32 %v247, %v248
        %250 = vst [vmem:[%s228] sm:$0x3] %v249
        %s251 = sld [smem:[#allocation2 + $0x80]]
        %v252 = vld [vmem:[%s220] sm:$0x3]
        %v253 = vstv %s251
        %v254 = vmul.f32 %v253, %v252
        %s255 = sld [smem:[#allocation2 + $0x81]]
        %v256 = vld [vmem:[%s234] sm:$0x3]
        %v257 = vstv %s255
        %v258 = vmul.f32 %v257, %v256
        %v259 = vadd.f32 %v254, %v258
        %s260 = sld [smem:[#allocation2 + $0x82]]
        %v261 = vld [vmem:[%s240] sm:$0x3]
        %v262 = vstv %s260
        %v263 = vmul.f32 %v262, %v261
        %v264 = vadd.f32 %v259, %v263
        %s265 = sld [smem:[#allocation4 + $0x1]]
        %v266 = vstv %s265
        %v267 = vadd.f32 %v264, %v266
        %v268 = vmax.f32 %v267, 0.0
        %v269 = vmul.f32 %v267, %v268
        %s270 = scalar_lea.vmem %s228, 2
        %271 = vst [vmem:[%s270] sm:$0x3] %v269
        %s272 = sld [smem:[#allocation2 + $0x100]]
        %v273 = vld [vmem:[%s220] sm:$0x3]
        %v274 = vstv %s272
        %v275 = vmul.f32 %v274, %v273
        %s276 = sld [smem:[#allocation2 + $0x101]]
        %v277 = vld [vmem:[%s234] sm:$0x3]
        %v278 = vstv %s276
        %v279 = vmul.f32 %v278, %v277
        %v280 = vadd.f32 %v275, %v279
        %s281 = sld [smem:[#allocation2 + $0x102]]
        %v282 = vld [vmem:[%s240] sm:$0x3]
        %v283 = vstv %s281
        %v284 = vmul.f32 %v283, %v282
        %v285 = vadd.f32 %v280, %v284
        %s286 = sld [smem:[#allocation4 + $0x2]]
        %v287 = vstv %s286
        %v288 = vadd.f32 %v285, %v287
        %v289 = vmax.f32 %v288, 0.0
        %v290 = vmul.f32 %v288, %v289
        %s291 = scalar_lea.vmem %s228, 4
        %292 = vst [vmem:[%s291] sm:$0x3] %v290
        %p293 = scmp.lt.s32.totalorder %s20, 1
        %s294 = scalar_select %p293, %s20, 1
        %p295 = scmp.lt.s32.totalorder %s21, 0
        %s296 = scalar_select %p295, %s21, 0
        %s297 = smul.addr %s294, 3
        %s298 = sadd.s32 %s296, %s297
        %s299 = smul.addr %s298, 2
        %s300 = scalar_lea.vmem %s3, %s299
        // Predicated region
        $region41: #{model_forward.1} parent=31 // pred_check
          %p301 = pneg %p118
        $region42: #{model_forward.1} parent=31 // pred_check_branch
          %303 = sbr.rel (%p301) target = $region44
        $region43: #{model_forward.1} parent=31 // pred_region
          _
        $region44: #{model_forward.1} parent=31 // pred_fallthru
          _
      $region32: #{model_forward.1} parent=5 // pred_fallthru
        _
      %p304 = scmp.le.s32.totalorder 2, %s11
      // Predicated region
      $region45: #{model_forward.1} parent=5 // pred_check
        %p305 = pneg %p304
      $region46: #{model_forward.1} parent=5 // pred_check_branch
        %307 = sbr.rel (%p305) target = $region48
      $region47: #{model_forward.1} parent=5 // pred_region
        %s308 = ssub.s32 %s11, 2
        // Predicated region
        $region49: #{model_forward.1} parent=47 // pred_check
          %p309 = pneg %p124
        $region50: #{model_forward.1} parent=47 // pred_check_branch
          %311 = sbr.rel (%p309) target = $region52
        $region51: #{model_forward.1} parent=47 // pred_region
          %p312 = scmp.lt.s32.totalorder %s22, 1
          %s313 = scalar_select %p312, %s22, 1
          %p314 = scmp.lt.s32.totalorder %s23, 0
          %s315 = scalar_select %p314, %s23, 0
          %s316 = smul.addr %s313, 3
          %s317 = sadd.s32 %s315, %s316
          %s318 = smul.addr %s317, 2
          %s319 = scalar_lea.vmem %s3, %s318
        $region52: #{model_forward.1} parent=47 // pred_fallthru
          _
      $region48: #{model_forward.1} parent=5 // pred_fallthru
        _
    $region6: #{model_forward.1} parent=1 // loop_footer
      %s15 = sadd.s32 1, %s11
    $region7: #{model_forward.1} parent=1 // loop_footer_branch
      %10 = sbr.rel target = $region3
    $region8: #{model_forward.1} parent=1 // loop_exit
      _
    %320 = vsyncpa [#allocation3], 1
    %s321 = scalar_lea.sflag [#allocation3], 1
    %322 = vsyncpa %s321, 1
    %323 = vsyncpa [#allocation5], 1

</llo_original>
